<compile_context>
chip_gen: v6e
topology: v6e:2x2x1
jax: 0.10.0
libtpu: 0.0.40
codegen_flags: <defaults>
</compile_context>

<pallas_src>
import jax
import jax.numpy as jnp
from jax.experimental import pallas as pl
from jax.experimental.pallas import tpu as pltpu

_LANE = 128  # vreg lane width; group is streamed as lane-dense (rows, 128) slabs


def _group_prefetch_kernel(group_hbm_ref, event_ref, buf, sem):
    """`TensorGroup.load()` on the memory stream.

    group_hbm_ref : (num_chunks, chunk_rows, 128) group slab, left in HBM.
    event_ref     : (1,) int32 SMEM "event recorded" token (output).
    buf           : (2, chunk_rows, 128) VMEM double buffer (scratch).
    sem           : (2,) DMA semaphores (scratch).
    """
    num_chunks = group_hbm_ref.shape[0]

    def chunk_copy(i, slot):
        return pltpu.make_async_copy(
            group_hbm_ref.at[i], buf.at[slot], sem.at[slot]
        )

    # Prime the pipeline: chunk 0 -> slot 0.
    chunk_copy(0, 0).start()

    @pl.loop(0, num_chunks)
    def _(i):
        slot = i & 1

        # Prefetch the next chunk into the other buffer while this one lands.
        @pl.when(i + 1 < num_chunks)
        def _():
            chunk_copy(i + 1, 1 - slot).start()

        # Wait for chunk i (destination buf.at[slot]).
        chunk_copy(i, slot).wait()
        # TODO(synk): a fused consumer would read buf.at[slot] here; in BRT the
        # loaded TensorGroup is consumed by downstream modules behind
        # EVENTS[event_id] (guard()).

    # EVENTS[event_id].record(MEMORY_STREAM) analogue.
    event_ref[0] = jnp.int32(1)


def load_tensor_group(tensor_group: jax.Array, *, chunk_rows: int = 512) -> jax.Array:
    """`TensorGroup.load()` analogue: async HBM->VMEM prefetch of the group.

    The group is presented to the kernel as a lane-dense
    (num_chunks, chunk_rows, 128) slab and streamed through a 2-deep VMEM
    double buffer, capping VMEM scratch at 2*chunk_rows*128*itemsize
    (512 KiB for f32 at the default chunk_rows) on every TPU generation.

    Returns a (1,) int32 event token (EVENTS[event_id].record analogue).
    """
    flat = tensor_group.reshape(-1)
    n = flat.shape[0]
    rows = -(-n // _LANE)
    chunk_rows = int(max(8, min(int(chunk_rows), rows)))
    num_chunks = -(-rows // chunk_rows)
    padded = num_chunks * chunk_rows * _LANE
    if padded != n:
        # In the real module the group buffer would already be laid out flat
        # and lane-aligned; padding here is a one-off wrapper-side fixup.
        flat = jnp.pad(flat, (0, padded - n))
    group3d = flat.reshape(num_chunks, chunk_rows, _LANE)

    return pl.pallas_call(
        _group_prefetch_kernel,
        out_shape=jax.ShapeDtypeStruct((1,), jnp.int32),
        in_specs=[
            # group stays in HBM; the kernel DMAs it chunk by chunk.
            pl.BlockSpec(memory_space=pl.ANY),
        ],
        out_specs=pl.BlockSpec(memory_space=pltpu.MemorySpace.SMEM),
        scratch_shapes=[
            pltpu.VMEM((2, chunk_rows, _LANE), tensor_group.dtype),
            pltpu.SemaphoreType.DMA((2,)),
        ],
        compiler_params=pltpu.CompilerParams(has_side_effects=True),
    )(group3d)


def grouped_predict_loader(
    x: jax.Array, tensor_group: jax.Array, *, chunk_rows: int = 512
) -> jax.Array:
    """forward(inputs): kick off the tensor-group prefetch, return inputs.

    The identity pass-through is zero-copy: `x` is returned directly and never
    touches the kernel (no HBM/VMEM traffic for it).  Only the group prefetch
    runs on-device.
    """
    load_tensor_group(tensor_group, chunk_rows=chunk_rows)  # "memory stream" load
    return x


if __name__ == "__main__":
    key = jax.random.PRNGKey(0)
    kx, kg = jax.random.split(key)

    # Inputs to forward(): NCHW activation tensor (pass-through payload).
    x = jax.random.normal(kx, (2, 4, 16, 16), dtype=jnp.float32)

    # Deterministic stand-in for the parameter TensorGroup that the loader
    # prefetches (synthetic init, not a checkpoint load).
    tensor_group = jax.random.normal(kg, (32, 128), dtype=jnp.float32)

    # Exercise the load() kernel directly and block on its event token so any
    # kernel failure surfaces synchronously.  chunk_rows=8 -> 4 chunks, which
    # exercises the double-buffered DMA loop even at this toy size.
    event = jax.block_until_ready(load_tensor_group(tensor_group, chunk_rows=8))
    assert event.shape == (1,) and int(event[0]) == 1

    # forward(inputs): prefetch the group, return inputs (zero-copy identity).
    out = grouped_predict_loader(x, tensor_group, chunk_rows=8)
    out = jax.block_until_ready(out)
    assert out.shape == x.shape and out.dtype == x.dtype
    assert bool(jnp.all(out == x))

    print("KERNEL_OK")
</pallas_src>

<mosaic_0001>
module attributes {stable_mosaic.version = 11 : i64} {
  func.func @_group_prefetch_kernel(%arg0: memref<4x8x128xf32, #tpu.memory_space<any>>, %arg1: memref<1xi32, #tpu.memory_space<smem>>, %arg2: memref<2x8x128xf32, #tpu.memory_space<vmem>>, %arg3: memref<2x!tpu.dma_semaphore, #tpu.memory_space<semaphore_mem>>) attributes {dimension_semantics = [], scalar_prefetch = 0 : i64, scratch_operands = 2 : i64, tpu.core_type = #tpu.core_type<tc>} {
    %c0_i32 = arith.constant 0 : i32
    %c0_i32_0 = arith.constant 0 : i32
    %c0_i32_1 = arith.constant 0 : i32
    %c0_i32_2 = arith.constant 0 : i32
    %c0_i32_3 = arith.constant 0 : i32
    %0 = tpu.memref_slice %arg0[%c0_i32, %c0_i32_2, %c0_i32_3] : memref<4x8x128xf32, #tpu.memory_space<any>> -> memref<1x8x128xf32, #tpu.memory_space<any>>
    %1 = tpu.memref_squeeze %0 : memref<1x8x128xf32, #tpu.memory_space<any>> -> memref<8x128xf32, #tpu.memory_space<any>>
    %c0_i32_4 = arith.constant 0 : i32
    %c0_i32_5 = arith.constant 0 : i32
    %2 = tpu.memref_slice %arg2[%c0_i32_0, %c0_i32_4, %c0_i32_5] : memref<2x8x128xf32, #tpu.memory_space<vmem>> -> memref<1x8x128xf32, #tpu.memory_space<vmem>>
    %3 = tpu.memref_squeeze %2 : memref<1x8x128xf32, #tpu.memory_space<vmem>> -> memref<8x128xf32, #tpu.memory_space<vmem>>
    %4 = tpu.memref_slice %arg3[%c0_i32_1] : memref<2x!tpu.dma_semaphore, #tpu.memory_space<semaphore_mem>> -> memref<1x!tpu.dma_semaphore, #tpu.memory_space<semaphore_mem>>
    %5 = tpu.memref_squeeze %4 : memref<1x!tpu.dma_semaphore, #tpu.memory_space<semaphore_mem>> -> memref<!tpu.dma_semaphore, #tpu.memory_space<semaphore_mem>>
    tpu.enqueue_dma source(%1 : memref<8x128xf32, #tpu.memory_space<any>>) target(%3 : memref<8x128xf32, #tpu.memory_space<vmem>>) target_semaphore(%5 : memref<!tpu.dma_semaphore, #tpu.memory_space<semaphore_mem>>)
    %c0_i32_6 = arith.constant 0 : i32
    %c4_i32 = arith.constant 4 : i32
    %6 = arith.addi %c0_i32_6, %c4_i32 : i32
    %c1_i32 = arith.constant 1 : i32
    scf.for %arg4 = %c0_i32_6 to %6 step %c1_i32  : i32 {
      %c1_i32_9 = arith.constant 1 : i32
      %8 = arith.muli %arg4, %c1_i32_9 : i32
      %c0_i32_10 = arith.constant 0 : i32
      %9 = arith.addi %c0_i32_10, %8 : i32
      %c1_i32_11 = arith.constant 1 : i32
      %10 = arith.andi %9, %c1_i32_11 : i32
      %c1_i32_12 = arith.constant 1 : i32
      %11 = arith.addi %9, %c1_i32_12 : i32
      %c4_i32_13 = arith.constant 4 : i32
      %12 = arith.cmpi slt, %11, %c4_i32_13 : i32
      %13 = arith.extui %12 : i1 to i32
      %c0_i32_14 = arith.constant 0 : i32
      %14 = arith.cmpi ne, %13, %c0_i32_14 : i32
      scf.if %14 {
        %c1_i32_19 = arith.constant 1 : i32
        %21 = arith.addi %9, %c1_i32_19 : i32
        %c1_i32_20 = arith.constant 1 : i32
        %22 = arith.subi %c1_i32_20, %10 : i32
        %c0_i32_21 = arith.constant 0 : i32
        %c0_i32_22 = arith.constant 0 : i32
        %23 = tpu.memref_slice %arg0[%21, %c0_i32_21, %c0_i32_22] : memref<4x8x128xf32, #tpu.memory_space<any>> -> memref<1x8x128xf32, #tpu.memory_space<any>>
        %24 = tpu.memref_squeeze %23 : memref<1x8x128xf32, #tpu.memory_space<any>> -> memref<8x128xf32, #tpu.memory_space<any>>
        %c0_i32_23 = arith.constant 0 : i32
        %c0_i32_24 = arith.constant 0 : i32
        %25 = tpu.memref_slice %arg2[%22, %c0_i32_23, %c0_i32_24] : memref<2x8x128xf32, #tpu.memory_space<vmem>> -> memref<1x8x128xf32, #tpu.memory_space<vmem>>
        %26 = tpu.memref_squeeze %25 : memref<1x8x128xf32, #tpu.memory_space<vmem>> -> memref<8x128xf32, #tpu.memory_space<vmem>>
        %27 = tpu.memref_slice %arg3[%22] : memref<2x!tpu.dma_semaphore, #tpu.memory_space<semaphore_mem>> -> memref<1x!tpu.dma_semaphore, #tpu.memory_space<semaphore_mem>>
        %28 = tpu.memref_squeeze %27 : memref<1x!tpu.dma_semaphore, #tpu.memory_space<semaphore_mem>> -> memref<!tpu.dma_semaphore, #tpu.memory_space<semaphore_mem>>
        tpu.enqueue_dma source(%24 : memref<8x128xf32, #tpu.memory_space<any>>) target(%26 : memref<8x128xf32, #tpu.memory_space<vmem>>) target_semaphore(%28 : memref<!tpu.dma_semaphore, #tpu.memory_space<semaphore_mem>>)
      } else {
      }
      %c0_i32_15 = arith.constant 0 : i32
      %c0_i32_16 = arith.constant 0 : i32
      %15 = tpu.memref_slice %arg0[%9, %c0_i32_15, %c0_i32_16] : memref<4x8x128xf32, #tpu.memory_space<any>> -> memref<1x8x128xf32, #tpu.memory_space<any>>
      %16 = tpu.memref_squeeze %15 : memref<1x8x128xf32, #tpu.memory_space<any>> -> memref<8x128xf32, #tpu.memory_space<any>>
      %c0_i32_17 = arith.constant 0 : i32
      %c0_i32_18 = arith.constant 0 : i32
      %17 = tpu.memref_slice %arg2[%10, %c0_i32_17, %c0_i32_18] : memref<2x8x128xf32, #tpu.memory_space<vmem>> -> memref<1x8x128xf32, #tpu.memory_space<vmem>>
      %18 = tpu.memref_squeeze %17 : memref<1x8x128xf32, #tpu.memory_space<vmem>> -> memref<8x128xf32, #tpu.memory_space<vmem>>
      %19 = tpu.memref_slice %arg3[%10] : memref<2x!tpu.dma_semaphore, #tpu.memory_space<semaphore_mem>> -> memref<1x!tpu.dma_semaphore, #tpu.memory_space<semaphore_mem>>
      %20 = tpu.memref_squeeze %19 : memref<1x!tpu.dma_semaphore, #tpu.memory_space<semaphore_mem>> -> memref<!tpu.dma_semaphore, #tpu.memory_space<semaphore_mem>>
      tpu.wait_dma2 semaphore(%20 : memref<!tpu.dma_semaphore, #tpu.memory_space<semaphore_mem>>) src(%16 : memref<8x128xf32, #tpu.memory_space<any>>) dst(%18 : memref<8x128xf32, #tpu.memory_space<vmem>>)
    }
    %c4_i32_7 = arith.constant 4 : i32
    %c1_i32_8 = arith.constant 1 : i32
    %c0 = arith.constant 0 : index
    %7 = memref.load %arg1[%c0] : memref<1xi32, #tpu.memory_space<smem>>
    memref.store %c1_i32_8, %arg1[%c0] : memref<1xi32, #tpu.memory_space<smem>>
    return
  }
}

</mosaic_0001>

<llo_original>
// kernel: tpu_custom_call.1
$region0: #{tpu_custom_call.1}
  #allocation0 [shape = 'u32[]', space=smem, size = 0x4, offset = 0x4, fixed_abs, tag = 'smem constant byte address 0x4 - core index']
  #allocation1 [shape = 'u32[144,128]{1,0:T(1,128)}', space=vmem, size = 0x12000, scoped, tag = 'internal scratch']
  #allocation2 [shape = 'f32[2,8,128]{2,1,0:T(8,128)}', space=vmem, size = 0x2000, scoped, tag = 'scratch operand']
  #allocation3 [shape = 's32[2]{0}', space=sflag, size = 0x8, scoped, tag = 'scratch operand']
  #allocation6 [shape = 's32[]', space=sflag, size = 0x4, offset = 0, fixed_abs, tag = 'sflag constant byte address 0x0 - dummy sync flag']
  #allocation7 [shape = 's32[]', space=sflag, size = 0x4, offset = 0, fixed_abs, tag = 'sflag constant byte address 0x0 - dummy sync flag']
  #allocation8 [shape = 'u32[]', space=smem, size = 0x4, offset = 0x44, fixed_abs, tag = 'smem constant byte address 0x44 - assertion arg 0']
  #allocation9 [shape = 'u32[]', space=smem, size = 0x4, offset = 0x48, fixed_abs, tag = 'smem constant byte address 0x48 - assertion arg 1']
  #allocation10 [shape = 's32[]', space=sflag, size = 0x4, offset = 0, fixed_abs, tag = 'sflag constant byte address 0x0 - dummy sync flag']
  #allocation11 [shape = 's32[]', space=sflag, size = 0x4, offset = 0, fixed_abs, tag = 'sflag constant byte address 0x0 - dummy sync flag']
  %s0 = inlined_call_operand.hbm [shape: f32[4,8,128], index: 0, kind: input, shape index: {}]
  %s1 = inlined_call_operand.hbm [shape: s32[1], index: 1, kind: output, shape index: {}]
  %s2 = sld [smem:[#allocation0]]
  $region29: #{tpu_custom_call.1} parent=0
    _
  %s4 = ssub.s32 1, %s2
  %s5 = scalar_select 0, %s4, %s2
  $region1: #{tpu_custom_call.1} parent=0
    #allocation4 [shape = 'u8[512]{0}', space=smem, size = 0x200, scoped, tag = 'output window, operand 0, single buffered']
    #allocation5 [shape = 's32[1]{0}', space=sflag, size = 0x4, scoped, tag = 'scoped memory for tpu_custom_call.1']
    %6 = vsyncpa [#allocation5], 0
    // Predicated region
    $region2: #{tpu_custom_call.1} parent=1 // pred_check
      _
    $region3: #{tpu_custom_call.1} parent=1 // pred_check_branch
      %8 = sbr.rel target = $region5
    $region4: #{tpu_custom_call.1} parent=1 // pred_region
      %9 = sst [smem:[#allocation8]] [#allocation7]
      %10 = sst [smem:[#allocation9]] [#allocation6]
    $region5: #{tpu_custom_call.1} parent=1 // pred_fallthru
      _
    %12 = shalt.err (0)
    %s14 = sshll.u32 [#allocation2], 4
    %s15 = int_to_ptr.vmem [resolvable:$true] %s14
    %17 = dma.hbm_to_vmem [thread:$0]  %s0, 128, %s15, [#allocation3]
    loop: start=0, step=1, limit=4
    $region6: #{tpu_custom_call.1} parent=1 // loop_pre_header
      _
    $region7: #{tpu_custom_call.1} parent=1 // loop_header
      %s19 = sphi 0, %s23
      %p20 = scmp.ge.s32.totalorder %s19, 4
    $region8: #{tpu_custom_call.1} parent=1 // loop_header_branch
      %22 = sbr.rel (%p20) target = $region12
    $region9: #{tpu_custom_call.1} parent=1 // loop_body
      %s24 = sand.u32 %s19, 1
      %s25 = sadd.s32 %s19, 1
      %p26 = scmp.lt.s32.totalorder %s25, 4
      // Predicated region
      $region13: #{tpu_custom_call.1} parent=9 // pred_check
        %p27 = pneg %p26
      $region14: #{tpu_custom_call.1} parent=9 // pred_check_branch
        %29 = sbr.rel (%p27) target = $region16
      $region15: #{tpu_custom_call.1} parent=9 // pred_region
        %s30 = ssub.s32 1, %s24
        %s31 = smul.u32 %s25, 8
        %s32 = smul.addr %s31, 16
        %s33 = scalar_lea.hbm %s0, %s32
        %s34 = smul.u32 %s30, 8
        %s35 = scalar_lea.vmem [#allocation2], %s34
        %s36 = scalar_lea.sflag [#allocation3], %s30
        // Predicated region
        $region17: #{tpu_custom_call.1} parent=15 // pred_check
          _
        $region18: #{tpu_custom_call.1} parent=15 // pred_check_branch
          %38 = sbr.rel target = $region20
        $region19: #{tpu_custom_call.1} parent=15 // pred_region
          %39 = sst [smem:[#allocation8]] [#allocation11]
          %40 = sst [smem:[#allocation9]] [#allocation10]
        $region20: #{tpu_custom_call.1} parent=15 // pred_fallthru
          _
        %42 = shalt.err (0)
        %s44 = sshll.u32 %s35, 4
        %s45 = int_to_ptr.vmem [resolvable:$true] %s44
        %47 = dma.hbm_to_vmem [thread:$0]  %s33, 128, %s45, %s36
      $region16: #{tpu_custom_call.1} parent=9 // pred_fallthru
        _
      %s48 = scalar_lea.sflag [#allocation3], %s24
      %s49 = smul.u32 8, 1
      %s50 = sshll.u32 %s49, 4
      %51 = dma.done %s48, %s50
    $region10: #{tpu_custom_call.1} parent=1 // loop_footer
      %s23 = sadd.s32 1, %s19
    $region11: #{tpu_custom_call.1} parent=1 // loop_footer_branch
      %18 = sbr.rel target = $region7
    $region12: #{tpu_custom_call.1} parent=1 // loop_exit
      _
    %s52 = scalar_lea.smem [#allocation4], 0
    %53 = sst [smem:[%s52]] 1
    // Predicated region
    $region21: #{tpu_custom_call.1} parent=1 // pred_check
      _
    $region22: #{tpu_custom_call.1} parent=1 // pred_check_branch
      %55 = sbr.rel (0) target = $region24
    $region23: #{tpu_custom_call.1} parent=1 // pred_region
      %s57 = ssub.s32 16, 16
      %58 = vsyncadd [#allocation5], %s57
      %61 = dma.smem_to_hbm [#allocation4], 16, %s1, [#allocation5]
    $region24: #{tpu_custom_call.1} parent=1 // pred_fallthru
      _
    // Predicated region
    $region25: #{tpu_custom_call.1} parent=1 // pred_check
      _
    $region26: #{tpu_custom_call.1} parent=1 // pred_check_branch
      %63 = sbr.rel (0) target = $region28
    $region27: #{tpu_custom_call.1} parent=1 // pred_region
      %64 = dma.done [#allocation5], 16
    $region28: #{tpu_custom_call.1} parent=1 // pred_fallthru
      _
    %65 = sfence
    %66 = vsyncpa [#allocation5], 1
  %67 = vsyncmov [#allocation3]
  %s68 = vpop.sfrf %67
  %p69 = scmp.eq.s32.totalorder %s68, 0
  %p70 = pneg %p69
  %72 = shalt.err (%p70)
  %s73 = scalar_lea.sflag [#allocation3], 1
  %74 = vsyncmov %s73
  %s75 = vpop.sfrf %74
  %p76 = scmp.eq.s32.totalorder %s75, 0
  %p77 = pneg %p76
  %79 = shalt.err (%p77)

</llo_original>
